<compile_context>
chip_gen: v6e
topology: v6e:2x2x1
jax: 0.10.0
libtpu: 0.0.40
codegen_flags: <defaults>
</compile_context>

<pallas_src>
import functools

import jax
import jax.numpy as jnp
from jax.experimental import pallas as pl
from jax.experimental.pallas import tpu as pltpu


def _round_up(x, m):
    return ((x + m - 1) // m) * m


def _vmem_budget_bytes():
    """~75% of per-core VMEM: ~48 MiB on v7x, ~96 MiB on v5e/v6e."""
    phys = 64 * 1024 * 1024
    try:
        info = pltpu.get_tpu_info()
        cap = getattr(info, "vmem_capacity_bytes", None)
        if cap:
            phys = int(cap)
    except Exception:
        pass
    return (phys * 3) // 4


def _choose_row_tiling(m, max_tm):
    """Pick (padded_rows, row_tile) with row_tile | padded_rows, row_tile % 8 == 0.

    Prefers divisors of the 8-rounded row count (no padding, no output slice)
    and >= 2 panels so the 'parallel' grid axis feeds both TensorCores.
    """
    max_tm = max(8, (max_tm // 8) * 8)
    mp = _round_up(m, 8)
    if mp <= max_tm:
        if mp >= 128 and mp % 16 == 0:
            return mp, mp // 2          # 2 panels -> both TCs get work
        return mp, mp                   # tiny problem: single panel
    hi = (min(max_tm, mp // 2) // 8) * 8
    for d in range(hi, 63, -8):         # largest divisor -> zero padding
        if mp % d == 0:
            return mp, d
    tm = max(8, (min(max_tm, 256) // 8) * 8)
    return _round_up(m, tm), tm         # rare: pad rows up to a tile multiple


def _choose_k_tiling(k, max_tk):
    max_tk = max(128, (max_tk // 128) * 128)
    kp = _round_up(k, 128)
    if kp <= max_tk:
        return kp, kp
    hi = (min(max_tk, kp) // 128) * 128
    for d in range(hi, 127, -128):
        if kp % d == 0:
            return kp, d
    tk = min(max_tk, 512)
    return _round_up(k, tk), tk


# ----------------------------------------------------------------------------
# Kernels
# ----------------------------------------------------------------------------
def _panel_kernel(a_ref, b_ref, o_ref, *, compute_dtype):
    """One (tm, D) output panel: full-K dot with the VMEM-resident RHS."""
    a = a_ref[...]
    b = b_ref[...]
    if compute_dtype is not None and a.dtype != compute_dtype:
        a = a.astype(compute_dtype)
    if compute_dtype is not None and b.dtype != compute_dtype:
        b = b.astype(compute_dtype)
    o_ref[...] = jnp.dot(a, b, preferred_element_type=jnp.float32).astype(o_ref.dtype)


def _acc_kernel(a_ref, b_ref, o_ref, *, compute_dtype):
    """K-split fallback: accumulate directly into the resident f32 output block."""
    @pl.when(pl.program_id(1) == 0)
    def _init():
        o_ref[...] = jnp.zeros_like(o_ref)

    a = a_ref[...]
    b = b_ref[...]
    if compute_dtype is not None and a.dtype != compute_dtype:
        a = a.astype(compute_dtype)
    if compute_dtype is not None and b.dtype != compute_dtype:
        b = b.astype(compute_dtype)
    o_ref[...] += jnp.dot(a, b, preferred_element_type=jnp.float32)


# ----------------------------------------------------------------------------
# Wrapper: SelfExpression.forward(x) == Coefficient @ x
# ----------------------------------------------------------------------------
def self_expression_matmul(coef, x, *, compute_dtype=None):
    """y = coef @ x with coef (n, n), x (n, D). Returns float32 (n, D).

    compute_dtype=None      -> matmul in the stored dtype (exact f32 semantics).
    compute_dtype=bfloat16  -> in-kernel cast of operands to bf16, f32 accum
                               (no extra HBM pass; for the MXU-bound regime).
    """
    m, k = coef.shape
    k2, n = x.shape
    assert k == k2, (coef.shape, x.shape)

    budget = _vmem_budget_bytes()
    a_item = jnp.dtype(coef.dtype).itemsize
    b_item = jnp.dtype(x.dtype).itemsize

    # ---- main path: x fully resident in VMEM, grid over coef row panels ----
    b_resident = 2 * k * n * b_item                 # double-buffer allowance
    per_row = 2 * k * a_item + 2 * n * 4            # A-panel row + f32 out row
    max_tm = (budget - b_resident) // max(per_row, 1)

    if max_tm >= 8:
        mp, tm = _choose_row_tiling(m, min(int(max_tm), 512))
        a = coef
        if mp != m:  # rare: zero rows only (exact; their outputs are sliced off)
            a = jnp.pad(coef, ((0, mp - m), (0, 0)))
        out = pl.pallas_call(
            functools.partial(_panel_kernel, compute_dtype=compute_dtype),
            out_shape=jax.ShapeDtypeStruct((mp, n), jnp.float32),
            grid_spec=pltpu.PrefetchScalarGridSpec(
                num_scalar_prefetch=0,
                grid=(mp // tm,),
                in_specs=[
                    pl.BlockSpec((tm, k), lambda i: (i, 0)),
                    pl.BlockSpec((k, n), lambda i: (0, 0)),   # resident RHS
                ],
                out_specs=pl.BlockSpec((tm, n), lambda i: (i, 0)),
            ),
            compiler_params=pltpu.CompilerParams(
                dimension_semantics=("parallel",),
                vmem_limit_bytes=int(budget),
            ),
        )(a, x)
        return out if mp == m else out[:m]

    # ---- fallback: n so large that x does not fit in VMEM -> tile K too ----
    kp, tk = _choose_k_tiling(k, 2048)
    per_row = 2 * tk * a_item + 2 * n * 4
    fixed = 2 * tk * n * b_item
    max_tm = (budget - fixed) // max(per_row, 1)
    mp, tm = _choose_row_tiling(m, max(8, min(int(max_tm), 512)))

    a, b = coef, x
    if mp != m or kp != k:
        a = jnp.pad(coef, ((0, mp - m), (0, kp - k)))
    if kp != k:
        b = jnp.pad(x, ((0, kp - k), (0, 0)))

    out = pl.pallas_call(
        functools.partial(_acc_kernel, compute_dtype=compute_dtype),
        out_shape=jax.ShapeDtypeStruct((mp, n), jnp.float32),
        grid_spec=pltpu.PrefetchScalarGridSpec(
            num_scalar_prefetch=0,
            grid=(mp // tm, kp // tk),
            in_specs=[
                pl.BlockSpec((tm, tk), lambda i, kk: (i, kk)),
                pl.BlockSpec((tk, n), lambda i, kk: (kk, 0)),
            ],
            out_specs=pl.BlockSpec((tm, n), lambda i, kk: (i, 0)),
        ),
        compiler_params=pltpu.CompilerParams(
            dimension_semantics=("parallel", "arbitrary"),
            vmem_limit_bytes=int(budget),
        ),
    )(a, b)
    return out if mp == m else out[:m]


# ----------------------------------------------------------------------------
# SelfExpression module equivalent.
# ----------------------------------------------------------------------------
def init_self_expression(n):
    """nn.Parameter(1e-8 * torch.ones(n, n)) equivalent."""
    return 1e-8 * jnp.ones((n, n), jnp.float32)


def self_expression_forward(coefficient, x, *, compute_dtype=None):
    return self_expression_matmul(coefficient, x, compute_dtype=compute_dtype)


if __name__ == "__main__":
    key = jax.random.PRNGKey(0)

    # --- 1) module-faithful tiny case: n samples of D-dim codes, 1e-8 init ---
    n, d = 8, 128
    key, kx = jax.random.split(key)
    x = jax.random.normal(kx, (n, d), jnp.float32)
    coefficient = init_self_expression(n)

    fwd = jax.jit(self_expression_forward)
    y = fwd(coefficient, x)
    jax.block_until_ready(y)
    assert y.shape == (n, d), y.shape
    y_ref = coefficient @ x
    assert jnp.allclose(y, y_ref, rtol=2e-2, atol=1e-9), \
        float(jnp.max(jnp.abs(y - y_ref)))

    # --- 2) multi-panel resident-RHS path, f32 operands ---
    n2, d2 = 640, 384
    key, kc, kx2 = jax.random.split(key, 3)
    coef2 = jax.random.normal(kc, (n2, n2), jnp.float32) / jnp.sqrt(jnp.float32(n2))
    x2 = jax.random.normal(kx2, (n2, d2), jnp.float32)

    y2 = fwd(coef2, x2)
    jax.block_until_ready(y2)
    assert y2.shape == (n2, d2), y2.shape
    y2_ref = jnp.dot(coef2, x2, precision=jax.lax.Precision.HIGHEST)
    rel2 = jnp.max(jnp.abs(y2 - y2_ref)) / (jnp.max(jnp.abs(y2_ref)) + 1e-6)
    assert float(rel2) < 2e-2, float(rel2)

    # --- 3) bf16 MXU fast path (in-kernel cast, f32 accumulation) ---
    fwd_bf16 = jax.jit(
        functools.partial(self_expression_forward, compute_dtype=jnp.bfloat16))
    y3 = fwd_bf16(coef2, x2)
    jax.block_until_ready(y3)
    y3_ref = jnp.dot(coef2.astype(jnp.bfloat16).astype(jnp.float32),
                     x2.astype(jnp.bfloat16).astype(jnp.float32))
    rel3 = jnp.max(jnp.abs(y3 - y3_ref)) / (jnp.max(jnp.abs(y3_ref)) + 1e-6)
    assert float(rel3) < 2e-2, float(rel3)

    print("KERNEL_OK")
</pallas_src>

<mosaic_0001>
module attributes {stable_mosaic.version = 11 : i64} {
  func.func @_panel_kernel(%arg0: i32, %arg1: memref<8x8xf32, #tpu.memory_space<vmem>>, %arg2: memref<8x128xf32, #tpu.memory_space<vmem>>, %arg3: memref<8x128xf32, #tpu.memory_space<vmem>>) attributes {dimension_semantics = [#tpu.dimension_semantics<parallel>], iteration_bounds = array<i64: 1>, scalar_prefetch = 0 : i64, scratch_operands = 0 : i64, tpu.core_type = #tpu.core_type<tc>, window_params = [{transform_indices = @transform_0, window_bounds = array<i64: 8, 8>}, {pipeline_mode = #tpu.pipeline_mode<synchronous>, transform_indices = @transform_1, window_bounds = array<i64: 8, 128>}, {transform_indices = @transform_2, window_bounds = array<i64: 8, 128>}]} {
    %c0 = arith.constant 0 : index
    %c0_0 = arith.constant 0 : index
    %0 = vector.load %arg1[%c0, %c0_0] : memref<8x8xf32, #tpu.memory_space<vmem>>, vector<8x8xf32>
    %c0_1 = arith.constant 0 : index
    %c0_2 = arith.constant 0 : index
    %1 = vector.load %arg2[%c0_1, %c0_2] : memref<8x128xf32, #tpu.memory_space<vmem>>, vector<8x128xf32>
    %cst = arith.constant dense<0.000000e+00> : vector<8x128xf32>
    %2 = tpu.matmul %0, %1, %cst {dimension_numbers = #tpu.dot_dimension_numbers<[1], [0], [0], [1], [0, 0, 1, 1], [], []>} : vector<8x8xf32>, vector<8x128xf32>, vector<8x128xf32> -> vector<8x128xf32>
    %c0_3 = arith.constant 0 : index
    %c0_4 = arith.constant 0 : index
    %3 = vector.load %arg3[%c0_3, %c0_4] : memref<8x128xf32, #tpu.memory_space<vmem>>, vector<8x128xf32>
    tpu.vector_store %arg3[%c0_3, %c0_4], %2 {strides = array<i32>} : memref<8x128xf32, #tpu.memory_space<vmem>>, vector<8x128xf32>,
    return
  }
  func.func @transform_0(%arg0: i32) -> (i32, i32) {
    %c0_i32 = arith.constant 0 : i32
    %c0_i32_0 = arith.constant 0 : i32
    return %arg0, %c0_i32 : i32, i32
  }
  func.func @transform_1(%arg0: i32) -> (i32, i32) {
    %c0_i32 = arith.constant 0 : i32
    %c0_i32_0 = arith.constant 0 : i32
    %c0_i32_1 = arith.constant 0 : i32
    return %c0_i32, %c0_i32_0 : i32, i32
  }
  func.func @transform_2(%arg0: i32) -> (i32, i32) {
    %c0_i32 = arith.constant 0 : i32
    %c0_i32_0 = arith.constant 0 : i32
    return %arg0, %c0_i32 : i32, i32
  }
}

</mosaic_0001>

<llo_original>
// kernel: self_expression_forward.1
$region0: #{self_expression_forward.1}
  #allocation0 [shape = 'u32[]', space=smem, size = 0x4, offset = 0x4, fixed_abs, tag = 'smem constant byte address 0x4 - core index']
  #allocation1 [shape = 'u32[144,128]{1,0:T(1,128)}', space=vmem, size = 0x12000, scoped, tag = 'internal scratch']
  %s0 = inlined_call_operand.hbm [shape: f32[8,8], index: 0, kind: input, shape index: {}]
  %s1 = inlined_call_operand.hbm [shape: f32[8,128], index: 1, kind: input, shape index: {}]
  %s2 = inlined_call_operand.hbm [shape: f32[8,128], index: 2, kind: output, shape index: {}]
  %s3 = sld [smem:[#allocation0]]
  $region26: #{self_expression_forward.1} parent=0
    _
  %s5 = ssub.s32 1, %s3
  %s6 = scalar_select 0, %s5, %s3
  $region1: #{self_expression_forward.1} parent=0
    #allocation2 [shape = 'u8[4096]{0}', space=vmem, size = 0x1000, scoped, tag = 'input window, operand 0, single buffered']
    #allocation3 [shape = 's32[1]{0}', space=sflag, size = 0x4, scoped, tag = 'scoped memory for self_expression_forward.1']
    #allocation4 [shape = 's32[1]{0}', space=sflag, size = 0x4, scoped, tag = 'scoped memory for self_expression_forward.1']
    #allocation5 [shape = 'u8[4096]{0}', space=vmem, size = 0x1000, scoped, tag = 'input window, operand 1, single buffered']
    #allocation6 [shape = 's32[1]{0}', space=sflag, size = 0x4, scoped, tag = 'scoped memory for self_expression_forward.1']
    #allocation7 [shape = 'u8[4096]{0}', space=vmem, size = 0x1000, scoped, tag = 'output window, operand 0, single buffered']
    %7 = vsyncpa [#allocation3], 0
    %8 = vsyncpa [#allocation6], 0
    %9 = vsyncpa [#allocation4], 0
    // Predicated region
    $region2: #{self_expression_forward.1} parent=1 // pred_check
      _
    $region3: #{self_expression_forward.1} parent=1 // pred_check_branch
      %11 = sbr.rel (0) target = $region5
    $region4: #{self_expression_forward.1} parent=1 // pred_region
      %s13 = ssub.s32 128, 128
      %14 = vsyncadd [#allocation3], %s13
      %s16 = sshll.u32 [#allocation2], 4
      %s17 = int_to_ptr.vmem [resolvable:$true] %s16
      %19 = dma.hbm_to_vmem [thread:$0]  %s0, 128, %s17, [#allocation3]
    $region5: #{self_expression_forward.1} parent=1 // pred_fallthru
      _
    // Predicated region
    $region6: #{self_expression_forward.1} parent=1 // pred_check
      _
    $region7: #{self_expression_forward.1} parent=1 // pred_check_branch
      %21 = sbr.rel (0) target = $region9
    $region8: #{self_expression_forward.1} parent=1 // pred_region
      %s23 = ssub.s32 128, 128
      %24 = vsyncadd [#allocation6], %s23
      %s26 = sshll.u32 [#allocation5], 4
      %s27 = int_to_ptr.vmem [resolvable:$true] %s26
      %29 = dma.hbm_to_vmem [thread:$0]  %s1, 128, %s27, [#allocation6]
    $region9: #{self_expression_forward.1} parent=1 // pred_fallthru
      _
    // Predicated region
    $region10: #{self_expression_forward.1} parent=1 // pred_check
      _
    $region11: #{self_expression_forward.1} parent=1 // pred_check_branch
      %31 = sbr.rel (0) target = $region13
    $region12: #{self_expression_forward.1} parent=1 // pred_region
      %32 = dma.done [#allocation3], 128
    $region13: #{self_expression_forward.1} parent=1 // pred_fallthru
      _
    // Predicated region
    $region14: #{self_expression_forward.1} parent=1 // pred_check
      _
    $region15: #{self_expression_forward.1} parent=1 // pred_check_branch
      %34 = sbr.rel (0) target = $region17
    $region16: #{self_expression_forward.1} parent=1 // pred_region
      %35 = dma.done [#allocation6], 128
    $region17: #{self_expression_forward.1} parent=1 // pred_fallthru
      _
    %v36 = vld [vmem:[#allocation2] sm:$0xff]
    %v37 = vld [vmem:[#allocation5] sm:$0xff]
    %vm38 = vcmask 64512
    %v40 = vsel %vm38, %v36, 0
    %42 = vmatprep.subr.mxu0 0.0
    %43 = vmatpush1.msra.mxu0 0.0
    %44 = vmatprep.subr.mxu0 0.0
    %45 = vmatpush1.msra.mxu0 0.0
    %46 = vmatprep.subr.mxu0 0.0
    %47 = vmatpush1.msra.mxu0 0.0
    %48 = vmatprep.subr.mxu0 0.0
    %49 = vmatpush1.msra.mxu0 0.0
    %50 = vmatprep.subr.mxu0 0.0
    %51 = vmatpush1.msra.mxu0 0.0
    %52 = vmatprep.subr.mxu0 0.0
    %53 = vmatpush1.msra.mxu0 0.0
    %54 = vmatprep.subr.mxu0 0.0
    %55 = vmatpush1.msra.mxu0 0.0
    %56 = vmatprep.subr.mxu0 0.0
    %57 = vmatpush1.msra.mxu0 0.0
    %58 = vmatprep.subr.mxu0 0.0
    %59 = vmatpush1.msra.mxu0 0.0
    %60 = vmatprep.subr.mxu0 0.0
    %61 = vmatpush1.msra.mxu0 0.0
    %62 = vmatprep.subr.mxu0 0.0
    %63 = vmatpush1.msra.mxu0 0.0
    %64 = vmatprep.subr.mxu0 0.0
    %65 = vmatpush1.msra.mxu0 0.0
    %66 = vmatprep.subr.mxu0 0.0
    %67 = vmatpush1.msra.mxu0 0.0
    %68 = vmatprep.subr.mxu0 0.0
    %69 = vmatpush1.msra.mxu0 0.0
    %70 = vmatprep.subr.mxu0 0.0
    %71 = vmatpush1.msra.mxu0 0.0
    %72 = vmatprep.subr.mxu0 0.0
    %73 = vmatpush1.msra.mxu0 %v37
    %74 = vmatprep.subr.mxu0 0.0
    %75 = vmatpush2.msra.mxu0 0.0
    %76 = vmatprep.subr.mxu0 0.0
    %77 = vmatpush2.msra.mxu0 0.0
    %78 = vmatprep.subr.mxu0 0.0
    %79 = vmatpush2.msra.mxu0 0.0
    %80 = vmatprep.subr.mxu0 0.0
    %81 = vmatpush2.msra.mxu0 0.0
    %82 = vmatprep.subr.mxu0 0.0
    %83 = vmatpush2.msra.mxu0 0.0
    %84 = vmatprep.subr.mxu0 0.0
    %85 = vmatpush2.msra.mxu0 0.0
    %86 = vmatprep.subr.mxu0 0.0
    %87 = vmatpush2.msra.mxu0 0.0
    %88 = vmatprep.subr.mxu0 0.0
    %89 = vmatpush2.msra.mxu0 0.0
    %90 = vmatprep.subr.mxu0 0.0
    %91 = vmatpush2.msra.mxu0 0.0
    %92 = vmatprep.subr.mxu0 0.0
    %93 = vmatpush2.msra.mxu0 0.0
    %94 = vmatprep.subr.mxu0 0.0
    %95 = vmatpush2.msra.mxu0 0.0
    %96 = vmatprep.subr.mxu0 0.0
    %97 = vmatpush2.msra.mxu0 0.0
    %98 = vmatprep.subr.mxu0 0.0
    %99 = vmatpush2.msra.mxu0 0.0
    %100 = vmatprep.subr.mxu0 0.0
    %101 = vmatpush2.msra.mxu0 0.0
    %102 = vmatprep.subr.mxu0 0.0
    %103 = vmatpush2.msra.mxu0 0.0
    %104 = vmatprep.subr.mxu0 0.0
    %105 = vmatpush2.msra.mxu0 0.0
    %106 = vmatprep.mubr.f32.mxu0 0.0
    %107 = vmatmul.mubr.f32.gmra.mxu0 %v40
    %v108 = vpop.f32.mrf.mxu0
    %v109 = vadd.f32 0.0, %v108
    %v110 = vpop.f32.mrf.mxu0
    %111 = vdwg.mxu0
    %112 = vst [vmem:[#allocation7] sm:$0xff] %v109
    // Predicated region
    $region18: #{self_expression_forward.1} parent=1 // pred_check
      _
    $region19: #{self_expression_forward.1} parent=1 // pred_check_branch
      %114 = sbr.rel (0) target = $region21
    $region20: #{self_expression_forward.1} parent=1 // pred_region
      %s116 = ssub.s32 128, 128
      %117 = vsyncadd [#allocation4], %s116
      %s119 = sshll.u32 [#allocation7], 4
      %s120 = int_to_ptr.vmem [resolvable:$true] %s119
      %122 = dma.vmem_to_hbm [thread:$0]  %s120, 128, %s2, [#allocation4]
    $region21: #{self_expression_forward.1} parent=1 // pred_fallthru
      _
    // Predicated region
    $region22: #{self_expression_forward.1} parent=1 // pred_check
      _
    $region23: #{self_expression_forward.1} parent=1 // pred_check_branch
      %124 = sbr.rel (0) target = $region25
    $region24: #{self_expression_forward.1} parent=1 // pred_region
      %125 = dma.done [#allocation4], 128
    $region25: #{self_expression_forward.1} parent=1 // pred_fallthru
      _
    %126 = vsyncpa [#allocation3], 1
    %127 = vsyncpa [#allocation6], 1
    %128 = vsyncpa [#allocation4], 1

</llo_original>
